<compile_context>
chip_gen: v6e
topology: v6e:2x2x1
jax: 0.10.0
libtpu: 0.0.40
codegen_flags: <defaults>
</compile_context>

<pallas_src>
import functools

import jax
import jax.numpy as jnp
from jax import lax
from jax.experimental import pallas as pl
from jax.experimental.pallas import tpu as pltpu


def _focal_loss_kernel(x_ref, t_ref, a_ref, out_ref, *, hw_valid, gamma,
                       needs_mask):
    j = pl.program_id(1)                       # pixel-tile index in the image

    @pl.when(j == 0)
    def _():
        out_ref[...] = jnp.zeros_like(out_ref)

    x = x_ref[0].astype(jnp.float32)           # (C, TM) logits, classes on sublanes
    ids = t_ref[0].astype(jnp.int32)           # (1, TM) target class ids
    alpha = a_ref[0].astype(jnp.float32)       # (C, 1)  per-class alpha

    c, tm = x.shape

    # --- log-softmax pieces over the class (sublane) axis ---
    m = jnp.max(x, axis=0, keepdims=True)                  # (1, TM)
    s = jnp.sum(jnp.exp(x - m), axis=0, keepdims=True)     # (1, TM)

    # --- one-hot class mask: sublane iota == target id ---
    cls = lax.broadcasted_iota(jnp.int32, (c, tm), 0)
    mask = (cls == ids).astype(jnp.float32)                # (C, TM)

    x_t = jnp.sum(x * mask, axis=0, keepdims=True)         # target-class logit
    a_t = jnp.sum(alpha * mask, axis=0, keepdims=True)     # target-class alpha

    log_p = (x_t - m) - jnp.log(s)                         # exact log p_t
    p_t = jnp.exp(log_p)
    one_minus = 1.0 - p_t
    g = float(gamma)
    if g == int(g) and g >= 0.0:
        focal = lax.integer_pow(one_minus, int(g))
    else:
        focal = jnp.power(one_minus, g)
    loss = -a_t * focal * log_p                            # (1, TM)

    if needs_mask:   # zero contributions from padded pixels in the last tile
        col = lax.broadcasted_iota(jnp.int32, (1, tm), 1) + j * tm
        loss = jnp.where(col < hw_valid, loss, 0.0)

    out_ref[...] += loss[None]       # lane-wide partial sum, VMEM-resident


def focal_loss(inputs, targets, alpha=None, gamma=2.0, size_average=True,
               max_tile=None):
    """Pallas TPU implementation of FocalLoss.forward.

    inputs:  (N, C, ...) float logits, softmax over axis 1 (NCHW for images).
    targets: integer class ids, shape = inputs.shape with axis 1 removed.
    """
    n, c = int(inputs.shape[0]), int(inputs.shape[1])
    hw = 1
    for d in inputs.shape[2:]:
        hw *= int(d)

    x3 = inputs.reshape(n, c, hw)                       # free reshape of NCHW
    t3 = targets.reshape(n, 1, hw).astype(jnp.int32)    # lane-dense targets

    if alpha is None:
        alpha_arr = jnp.ones((c,), jnp.float32)         # torch.ones(class_num, 1)
    else:
        alpha_arr = jnp.asarray(alpha, jnp.float32).reshape(c)
    a3 = alpha_arr.reshape(1, c, 1)

    # --- pick a lane-dense pixel tile (~1 MiB of logits per block) ---
    if max_tile is None:
        max_tile = (1 << 20) // (c * 4)
    max_tile = max(128, (max_tile // 128) * 128)

    if hw <= max_tile:
        tile_m = hw            # single tile: block == full dim, no padding
        hw_pad = hw
    else:
        tile_m = 0
        d = max_tile
        while d >= 128:        # prefer a tile that divides HW (skip the pad copy)
            if hw % d == 0:
                tile_m = d
                break
            d -= 128
        if tile_m:
            hw_pad = hw
        else:
            tile_m = max_tile
            hw_pad = ((hw + tile_m - 1) // tile_m) * tile_m
            x3 = jnp.pad(x3, ((0, 0), (0, 0), (0, hw_pad - hw)))
            t3 = jnp.pad(t3, ((0, 0), (0, 0), (0, hw_pad - hw)))
    needs_mask = hw_pad != hw

    kernel = functools.partial(_focal_loss_kernel, hw_valid=hw,
                               gamma=float(gamma), needs_mask=needs_mask)

    partial = pl.pallas_call(
        kernel,
        out_shape=jax.ShapeDtypeStruct((n, 1, tile_m), jnp.float32),
        grid=(n, hw_pad // tile_m),
        in_specs=[
            pl.BlockSpec((1, c, tile_m), lambda i, j: (i, 0, j)),   # logits
            pl.BlockSpec((1, 1, tile_m), lambda i, j: (i, 0, j)),   # targets
            pl.BlockSpec((1, c, 1), lambda i, j: (0, 0, 0)),        # alpha
        ],
        out_specs=pl.BlockSpec((1, 1, tile_m), lambda i, j: (i, 0, 0)),
        compiler_params=pltpu.CompilerParams(
            dimension_semantics=("parallel", "arbitrary"),
            vmem_limit_bytes=32 * 1024 * 1024),
    )(x3, t3, a3)

    total = jnp.sum(partial)            # tiny reduce of per-image partial rows
    if size_average:
        total = total / jnp.float32(n * hw)
    return total


def _focal_loss_ref(inputs, targets, alpha=None, gamma=2.0, size_average=True):
    c = inputs.shape[1]
    if alpha is None:
        alpha = jnp.ones((c,), jnp.float32)
    p = jax.nn.softmax(inputs.astype(jnp.float32), axis=1)
    perm = (0,) + tuple(range(2, inputs.ndim)) + (1,)
    p2 = jnp.transpose(p, perm).reshape(-1, c)
    ids = targets.reshape(-1)
    p_t = jnp.take_along_axis(p2, ids[:, None], axis=1)[:, 0]
    a_t = jnp.asarray(alpha, jnp.float32).reshape(-1)[ids]
    loss = -a_t * jnp.power(1.0 - p_t, gamma) * jnp.log(p_t)
    return jnp.mean(loss) if size_average else jnp.sum(loss)


if __name__ == "__main__":
    key = jax.random.PRNGKey(0)
    k1, k2, k3, k4 = jax.random.split(key, 4)

    # main check: default module config (class_num=5, gamma=2, mean)
    N, C, H, W = 2, 5, 16, 16
    inputs = jax.random.normal(k1, (N, C, H, W), dtype=jnp.float32)
    targets = jax.random.randint(k2, (N, H, W), 0, C, dtype=jnp.int32)

    loss = focal_loss(inputs, targets, gamma=2.0, size_average=True)
    loss = jax.block_until_ready(loss)
    ref = _focal_loss_ref(inputs, targets, gamma=2.0, size_average=True)
    assert jnp.allclose(loss, ref, rtol=1e-5, atol=1e-6), (loss, ref)

    # ragged-tail path: HW=300 not divisible by a 128-multiple tile -> pad+mask
    x2 = jax.random.normal(k3, (1, C, 10, 30), dtype=jnp.float32)
    t2 = jax.random.randint(k4, (1, 10, 30), 0, C, dtype=jnp.int32)
    loss2 = focal_loss(x2, t2, gamma=2.0, size_average=False, max_tile=128)
    loss2 = jax.block_until_ready(loss2)
    ref2 = _focal_loss_ref(x2, t2, gamma=2.0, size_average=False)
    assert jnp.allclose(loss2, ref2, rtol=1e-5, atol=1e-5), (loss2, ref2)

    print("KERNEL_OK")
</pallas_src>

<mosaic_0001>
module attributes {stable_mosaic.version = 11 : i64} {
  func.func @_focal_loss_kernel(%arg0: i32, %arg1: i32, %arg2: memref<1x5x256xf32, #tpu.memory_space<vmem>>, %arg3: memref<1x1x256xi32, #tpu.memory_space<vmem>>, %arg4: memref<1x5x1xf32, #tpu.memory_space<vmem>>, %arg5: memref<1x1x256xf32, #tpu.memory_space<vmem>>) attributes {dimension_semantics = [#tpu.dimension_semantics<parallel>, #tpu.dimension_semantics<arbitrary>], iteration_bounds = array<i64: 2, 1>, scalar_prefetch = 0 : i64, scratch_operands = 0 : i64, tpu.core_type = #tpu.core_type<tc>, window_params = [{transform_indices = @transform_0, window_bounds = array<i64: 1, 5, 256>}, {transform_indices = @transform_1, window_bounds = array<i64: 1, 1, 256>}, {pipeline_mode = #tpu.pipeline_mode<synchronous>, transform_indices = @transform_2, window_bounds = array<i64: 1, 5, 1>}, {transform_indices = @transform_3, window_bounds = array<i64: 1, 1, 256>}]} {
    %c0_i32 = arith.constant 0 : i32
    %0 = arith.cmpi eq, %arg1, %c0_i32 : i32
    %1 = arith.extui %0 : i1 to i32
    %c0_i32_0 = arith.constant 0 : i32
    %2 = arith.cmpi ne, %1, %c0_i32_0 : i32
    scf.if %2 {
      %cst_20 = arith.constant 0.000000e+00 : f32
      %43 = vector.broadcast %cst_20 : f32 to vector<1x1x256xf32>
      %c0_21 = arith.constant 0 : index
      %c0_22 = arith.constant 0 : index
      %c0_23 = arith.constant 0 : index
      %44 = vector.load %arg5[%c0_21, %c0_22, %c0_23] : memref<1x1x256xf32, #tpu.memory_space<vmem>>, vector<1x1x256xf32>
      tpu.vector_store %arg5[%c0_21, %c0_22, %c0_23], %43 {strides = array<i32>} : memref<1x1x256xf32, #tpu.memory_space<vmem>>, vector<1x1x256xf32>,
    } else {
    }
    %c0 = arith.constant 0 : index
    %c0_1 = arith.constant 0 : index
    %c0_2 = arith.constant 0 : index
    %3 = vector.load %arg2[%c0, %c0_1, %c0_2] : memref<1x5x256xf32, #tpu.memory_space<vmem>>, vector<1x5x256xf32>
    %4 = vector.shape_cast %3 : vector<1x5x256xf32> to vector<5x256xf32>
    %c0_3 = arith.constant 0 : index
    %c0_4 = arith.constant 0 : index
    %c0_5 = arith.constant 0 : index
    %5 = vector.load %arg3[%c0_3, %c0_4, %c0_5] : memref<1x1x256xi32, #tpu.memory_space<vmem>>, vector<1x1x256xi32>
    %6 = vector.shape_cast %5 : vector<1x1x256xi32> to vector<1x256xi32>
    %c0_6 = arith.constant 0 : index
    %c0_7 = arith.constant 0 : index
    %c0_8 = arith.constant 0 : index
    %7 = vector.load %arg4[%c0_6, %c0_7, %c0_8] : memref<1x5x1xf32, #tpu.memory_space<vmem>>, vector<1x5x1xf32>
    %8 = vector.shape_cast %7 : vector<1x5x1xf32> to vector<5x1xf32>
    %cst = arith.constant dense<0xFF800000> : vector<256xf32>
    %9 = vector.multi_reduction <maximumf>, %4, %cst [0] : vector<5x256xf32> to vector<256xf32>
    %10 = vector.shape_cast %9 : vector<256xf32> to vector<1x256xf32>
    %11 = vector.broadcast %10 : vector<1x256xf32> to vector<5x256xf32>
    %12 = arith.subf %4, %11 : vector<5x256xf32>
    %13 = math.exp %12 : vector<5x256xf32>
    %cst_9 = arith.constant dense<0.000000e+00> : vector<256xf32>
    %14 = vector.multi_reduction <add>, %13, %cst_9 [0] : vector<5x256xf32> to vector<256xf32>
    %15 = vector.shape_cast %14 : vector<256xf32> to vector<1x256xf32>
    %16 = tpu.iota {dimensions = array<i32: 0>} : vector<5x256xi32>
    %17 = vector.broadcast %6 : vector<1x256xi32> to vector<5x256xi32>
    %18 = arith.cmpi eq, %16, %17 : vector<5x256xi32>
    %19 = arith.extui %18 : vector<5x256xi1> to vector<5x256xi32>
    %20 = arith.sitofp %19 : vector<5x256xi32> to vector<5x256xf32>
    %21 = arith.mulf %4, %20 : vector<5x256xf32>
    %cst_10 = arith.constant dense<0.000000e+00> : vector<256xf32>
    %22 = vector.multi_reduction <add>, %21, %cst_10 [0] : vector<5x256xf32> to vector<256xf32>
    %23 = vector.shape_cast %22 : vector<256xf32> to vector<1x256xf32>
    %24 = vector.broadcast %8 : vector<5x1xf32> to vector<5x256xf32>
    %25 = arith.mulf %24, %20 : vector<5x256xf32>
    %cst_11 = arith.constant dense<0.000000e+00> : vector<256xf32>
    %26 = vector.multi_reduction <add>, %25, %cst_11 [0] : vector<5x256xf32> to vector<256xf32>
    %27 = vector.shape_cast %26 : vector<256xf32> to vector<1x256xf32>
    %28 = arith.subf %23, %10 : vector<1x256xf32>
    %29 = math.log %15 : vector<1x256xf32>
    %30 = arith.subf %28, %29 : vector<1x256xf32>
    %31 = math.exp %30 : vector<1x256xf32>
    %cst_12 = arith.constant 1.000000e+00 : f32
    %32 = vector.broadcast %cst_12 : f32 to vector<1x256xf32>
    %33 = arith.subf %32, %31 : vector<1x256xf32>
    %34 = arith.mulf %33, %33 : vector<1x256xf32>
    %cst_13 = arith.constant 0.000000e+00 : f32
    %35 = vector.broadcast %cst_13 : f32 to vector<1x256xf32>
    %36 = arith.subf %35, %27 : vector<1x256xf32>
    %37 = arith.mulf %36, %34 : vector<1x256xf32>
    %38 = arith.mulf %37, %30 : vector<1x256xf32>
    %c0_14 = arith.constant 0 : index
    %c0_15 = arith.constant 0 : index
    %c0_16 = arith.constant 0 : index
    %39 = vector.load %arg5[%c0_14, %c0_15, %c0_16] : memref<1x1x256xf32, #tpu.memory_space<vmem>>, vector<1x1x256xf32>
    %40 = vector.shape_cast %38 : vector<1x256xf32> to vector<1x1x256xf32>
    %41 = arith.addf %39, %40 : vector<1x1x256xf32>
    %c0_17 = arith.constant 0 : index
    %c0_18 = arith.constant 0 : index
    %c0_19 = arith.constant 0 : index
    %42 = vector.load %arg5[%c0_17, %c0_18, %c0_19] : memref<1x1x256xf32, #tpu.memory_space<vmem>>, vector<1x1x256xf32>
    tpu.vector_store %arg5[%c0_17, %c0_18, %c0_19], %41 {strides = array<i32>} : memref<1x1x256xf32, #tpu.memory_space<vmem>>, vector<1x1x256xf32>,
    return
  }
  func.func @transform_0(%arg0: i32, %arg1: i32) -> (i32, i32, i32) {
    %c0_i32 = arith.constant 0 : i32
    %c0_i32_0 = arith.constant 0 : i32
    return %arg0, %c0_i32, %arg1 : i32, i32, i32
  }
  func.func @transform_1(%arg0: i32, %arg1: i32) -> (i32, i32, i32) {
    %c0_i32 = arith.constant 0 : i32
    %c0_i32_0 = arith.constant 0 : i32
    return %arg0, %c0_i32, %arg1 : i32, i32, i32
  }
  func.func @transform_2(%arg0: i32, %arg1: i32) -> (i32, i32, i32) {
    %c0_i32 = arith.constant 0 : i32
    %c0_i32_0 = arith.constant 0 : i32
    %c0_i32_1 = arith.constant 0 : i32
    %c0_i32_2 = arith.constant 0 : i32
    return %c0_i32, %c0_i32_0, %c0_i32_1 : i32, i32, i32
  }
  func.func @transform_3(%arg0: i32, %arg1: i32) -> (i32, i32, i32) {
    %c0_i32 = arith.constant 0 : i32
    %c0_i32_0 = arith.constant 0 : i32
    %c0_i32_1 = arith.constant 0 : i32
    return %arg0, %c0_i32, %c0_i32_0 : i32, i32, i32
  }
}

</mosaic_0001>

<llo_original>
// kernel: tpu_custom_call.1
$region0: #{tpu_custom_call.1}
  #allocation0 [shape = 'u32[]', space=smem, size = 0x4, offset = 0x4, fixed_abs, tag = 'smem constant byte address 0x4 - core index']
  #allocation1 [shape = 'u32[144,128]{1,0:T(1,128)}', space=vmem, size = 0x12000, scoped, tag = 'internal scratch']
  %s0 = inlined_call_operand.vmem [shape: f32[2,5,256], index: 0, kind: input, shape index: {}]
  %s1 = inlined_call_operand.vmem [shape: s32[2,1,256], index: 1, kind: input, shape index: {}]
  %s2 = inlined_call_operand.vmem [shape: f32[1,5,1], index: 2, kind: input, shape index: {}]
  %s3 = inlined_call_operand.hbm [shape: f32[2,1,256], index: 3, kind: output, shape index: {}]
  %s4 = sld [smem:[#allocation0]]
  $region49: #{tpu_custom_call.1} parent=0
    _
  %s6 = ssub.s32 1, %s4
  %s7 = scalar_select 0, %s6, %s4
  $region1: #{tpu_custom_call.1} parent=0
    #allocation2 [shape = 'u8[2048]{0}', space=vmem, size = 0x800, scoped, tag = 'output window, operand 0']
    #allocation3 [shape = 's32[2]{0}', space=sflag, size = 0x8, scoped, tag = 'scoped memory for tpu_custom_call.1']
    %8 = vsyncpa [#allocation3], 0
    %s9 = scalar_lea.sflag [#allocation3], 1
    %10 = vsyncpa %s9, 0
    loop: start=0, step=1, limit=4
    $region2: #{tpu_custom_call.1} parent=1 // loop_pre_header
      _
    $region3: #{tpu_custom_call.1} parent=1 // loop_header
      %s12 = sphi 0, %s16
      %p13 = scmp.ge.s32.totalorder %s12, 4
      %s19 = sphi 0, %s31
      %s20 = sphi 0, %s27
      %s21 = sphi 0, %s19
      %s22 = sphi 0, %s20
      %s23 = sphi 0, %s21
      %s24 = sphi 0, %s22
      %s36 = sphi 0, %s38
      %s39 = sphi 0, %s36
      %s40 = sphi 0, %s39
      %s56 = sphi 0, %s40
      %s64 = sphi 0, %s66
      %s67 = sphi 0, %s64
      %s68 = sphi 0, %s67
      %s84 = sphi 0, %s68
      %s88 = sphi 0, %s88
      %s90 = sphi 0, %s88
      %s91 = sphi 0, %s90
      %s105 = sphi 0, %s91
      %s111 = sphi 0, %s113
      %s114 = sphi 0, %s111
      %s115 = sphi 0, %s114
      %s131 = sphi 0, %s115
    $region4: #{tpu_custom_call.1} parent=1 // loop_header_branch
      %15 = sbr.rel (%p13) target = $region8
    $region5: #{tpu_custom_call.1} parent=1 // loop_body
      %s17 = ssub.s32 %s12, 1
      %s18 = ssub.s32 %s12, 2
      %s25 = sadd.s32 1, %s20
      %p26 = scmp.ge.s32.totalorder %s25, 1
      %s27 = scalar_select %p26, 0, %s25
      %s28 = sadd.s32 1, %s19
      %s29 = scalar_select %p26, %s28, %s19
      %p30 = scmp.ge.s32.totalorder %s29, 2
      %s31 = scalar_select %p30, 0, %s29
      %s32 = ssub.s32 %s19, %s31
      %s33 = ssub.s32 %s20, %s27
      %s34 = sor.u32 %s32, %s33
      %p35 = scmp.eq.s32.totalorder %s34, 0
      %s37 = sadd.s32 %s36, 1
      %s38 = scalar_select %p35, %s36, %s37
      %p41 = pneg %p35
      %p42 = scmp.eq.s32.totalorder %s12, 1
      %p43 = por %p41, %p42
      %p44 = scmp.ne.s32.totalorder %s36, %s39
      %p45 = scmp.eq.s32.totalorder %s12, 0
      %p46 = por %p44, %p45
      %p47 = scmp.ne.s32.totalorder %s36, %s39
      %p48 = scmp.eq.s32.totalorder %s17, 1
      %p49 = por %p47, %p48
      %p50 = scmp.ne.s32.totalorder %s39, %s40
      %p51 = scmp.eq.s32.totalorder %s17, 0
      %p52 = por %p50, %p51
      %p53 = scmp.ne.s32.totalorder %s39, %s40
      %p54 = scmp.eq.s32.totalorder %s18, 1
      %p55 = por %p53, %p54
      %p57 = scmp.ne.s32.totalorder %s40, %s56
      %p58 = scmp.eq.s32.totalorder %s18, 0
      %p59 = por %p57, %p58
      %s60 = ssub.s32 %s19, %s31
      %s61 = ssub.s32 %s20, %s27
      %s62 = sor.u32 %s60, %s61
      %p63 = scmp.eq.s32.totalorder %s62, 0
      %s65 = sadd.s32 %s64, 1
      %s66 = scalar_select %p63, %s64, %s65
      %p69 = pneg %p63
      %p70 = scmp.eq.s32.totalorder %s12, 1
      %p71 = por %p69, %p70
      %p72 = scmp.ne.s32.totalorder %s64, %s67
      %p73 = scmp.eq.s32.totalorder %s12, 0
      %p74 = por %p72, %p73
      %p75 = scmp.ne.s32.totalorder %s64, %s67
      %p76 = scmp.eq.s32.totalorder %s17, 1
      %p77 = por %p75, %p76
      %p78 = scmp.ne.s32.totalorder %s67, %s68
      %p79 = scmp.eq.s32.totalorder %s17, 0
      %p80 = por %p78, %p79
      %p81 = scmp.ne.s32.totalorder %s67, %s68
      %p82 = scmp.eq.s32.totalorder %s18, 1
      %p83 = por %p81, %p82
      %p85 = scmp.ne.s32.totalorder %s68, %s84
      %p86 = scmp.eq.s32.totalorder %s18, 0
      %p87 = por %p85, %p86
      %s89 = sadd.s32 %s88, 1
      %p92 = scmp.eq.s32.totalorder %s12, 1
      %p93 = scmp.ne.s32.totalorder %s88, %s90
      %p94 = scmp.eq.s32.totalorder %s12, 0
      %p95 = por %p93, %p94
      %p96 = scmp.ne.s32.totalorder %s88, %s90
      %p97 = scmp.eq.s32.totalorder %s17, 1
      %p98 = por %p96, %p97
      %p99 = scmp.ne.s32.totalorder %s90, %s91
      %p100 = scmp.eq.s32.totalorder %s17, 0
      %p101 = por %p99, %p100
      %p102 = scmp.ne.s32.totalorder %s90, %s91
      %p103 = scmp.eq.s32.totalorder %s18, 1
      %p104 = por %p102, %p103
      %p106 = scmp.ne.s32.totalorder %s91, %s105
      %p107 = scmp.eq.s32.totalorder %s18, 0
      %p108 = por %p106, %p107
      %s109 = ssub.s32 %s19, %s31
      %p110 = scmp.eq.s32.totalorder %s109, 0
      %s112 = sadd.s32 %s111, 1
      %s113 = scalar_select %p110, %s111, %s112
      %p116 = pneg %p110
      %p117 = scmp.eq.s32.totalorder %s12, 1
      %p118 = por %p116, %p117
      %p119 = scmp.ne.s32.totalorder %s111, %s114
      %p120 = scmp.eq.s32.totalorder %s12, 0
      %p121 = por %p119, %p120
      %p122 = scmp.ne.s32.totalorder %s111, %s114
      %p123 = scmp.eq.s32.totalorder %s17, 1
      %p124 = por %p122, %p123
      %p125 = scmp.ne.s32.totalorder %s114, %s115
      %p126 = scmp.eq.s32.totalorder %s17, 0
      %p127 = por %p125, %p126
      %p128 = scmp.ne.s32.totalorder %s114, %s115
      %p129 = scmp.eq.s32.totalorder %s18, 1
      %p130 = por %p128, %p129
      %p132 = scmp.ne.s32.totalorder %s115, %s131
      %p133 = scmp.eq.s32.totalorder %s18, 0
      %p134 = por %p132, %p133
      %p135 = scmp.le.s32.totalorder 1, %s12
      %p136 = scmp.lt.s32.totalorder %s12, 3
      %p137 = pnand %p135, %p136
      %p138 = pneg %p137
      // Predicated region
      $region9: #{tpu_custom_call.1} parent=5 // pred_check
        _
      $region10: #{tpu_custom_call.1} parent=5 // pred_check_branch
        %140 = sbr.rel (%p137) target = $region12
      $region11: #{tpu_custom_call.1} parent=5 // pred_region
        %s141 = ssub.s32 %s12, 1
        // Predicated region
        $region13: #{tpu_custom_call.1} parent=11 // pred_check
          %p142 = pneg %p101
        $region14: #{tpu_custom_call.1} parent=11 // pred_check_branch
          %144 = sbr.rel (%p142) target = $region16
        $region15: #{tpu_custom_call.1} parent=11 // pred_region
          _
        $region16: #{tpu_custom_call.1} parent=11 // pred_fallthru
          _
      $region12: #{tpu_custom_call.1} parent=5 // pred_fallthru
        _
      %p145 = scmp.lt.s32.totalorder %s12, 2
      // Predicated region
      $region17: #{tpu_custom_call.1} parent=5 // pred_check
        %p146 = pneg %p145
      $region18: #{tpu_custom_call.1} parent=5 // pred_check_branch
        %148 = sbr.rel (%p146) target = $region20
      $region19: #{tpu_custom_call.1} parent=5 // pred_region
        // Predicated region
        $region21: #{tpu_custom_call.1} parent=19 // pred_check
          %p149 = pneg %p46
        $region22: #{tpu_custom_call.1} parent=19 // pred_check_branch
          %151 = sbr.rel (%p149) target = $region24
        $region23: #{tpu_custom_call.1} parent=19 // pred_region
          %s152 = smul.u32 2, %s20
          %p153 = scmp.lt.s32.totalorder %s19, 1
          %s154 = scalar_select %p153, %s19, 1
          %p155 = scmp.lt.s32.totalorder %s152, 1
          %s156 = scalar_select %p155, %s152, 1
          %s157 = smul.addr %s154, 2
          %s158 = sadd.s32 %s156, %s157
          %s159 = smul.addr %s158, 8
          %s160 = scalar_lea.vmem %s0, %s159
          %s161 = smul.u32 2, %s20
        $region24: #{tpu_custom_call.1} parent=19 // pred_fallthru
          _
        // Predicated region
        $region25: #{tpu_custom_call.1} parent=19 // pred_check
          %p162 = pneg %p74
        $region26: #{tpu_custom_call.1} parent=19 // pred_check_branch
          %164 = sbr.rel (%p162) target = $region28
        $region27: #{tpu_custom_call.1} parent=19 // pred_region
          %s165 = smul.u32 2, %s20
          %p166 = scmp.lt.s32.totalorder %s19, 1
          %s167 = scalar_select %p166, %s19, 1
          %p168 = scmp.lt.s32.totalorder %s165, 1
          %s169 = scalar_select %p168, %s165, 1
          %s170 = smul.addr %s167, 2
          %s171 = sadd.s32 %s169, %s170
          %s172 = scalar_lea.vmem %s1, %s171
          %s173 = smul.u32 2, %s20
        $region28: #{tpu_custom_call.1} parent=19 // pred_fallthru
          _
      $region20: #{tpu_custom_call.1} parent=5 // pred_fallthru
        _
      %p174 = scmp.le.s32.totalorder 1, %s12
      %p175 = scmp.lt.s32.totalorder %s12, 3
      %p176 = pnand %p174, %p175
      %p177 = pneg %p176
      // Predicated region
      $region29: #{tpu_custom_call.1} parent=5 // pred_check
        _
      $region30: #{tpu_custom_call.1} parent=5 // pred_check_branch
        %179 = sbr.rel (%p176) target = $region32
      $region31: #{tpu_custom_call.1} parent=5 // pred_region
        %s180 = ssub.s32 %s12, 1
        %s181 = smul.u32 2, %s22
        %p182 = scmp.lt.s32.totalorder %s21, 1
        %s183 = scalar_select %p182, %s21, 1
        %p184 = scmp.lt.s32.totalorder %s181, 1
        %s185 = scalar_select %p184, %s181, 1
        %s186 = smul.addr %s183, 2
        %s187 = sadd.s32 %s185, %s186
        %s188 = smul.addr %s187, 8
        %s189 = scalar_lea.vmem %s0, %s188
        %p190 = pneg %p52
        %p191 = pneg %p49
        %s192 = smul.u32 2, %s22
        %p193 = scmp.lt.s32.totalorder %s21, 1
        %s194 = scalar_select %p193, %s21, 1
        %p195 = scmp.lt.s32.totalorder %s192, 1
        %s196 = scalar_select %p195, %s192, 1
        %s197 = smul.addr %s194, 2
        %s198 = sadd.s32 %s196, %s197
        %s199 = scalar_lea.vmem %s1, %s198
        %p200 = pneg %p80
        %p201 = pneg %p77
        %p202 = pneg %p101
        %p203 = pneg %p98
        %p204 = pneg %p127
        %p205 = pneg %p124
        %s206 = sand.u32 %s114, 1
        %s207 = scalar_lea.sflag [#allocation3], %s206
        %s208 = sand.u32 %s114, 1
        %s209 = smul.addr %s208, 2
        %s210 = scalar_lea.vmem [#allocation2], %s209
        %s211 = smul.u32 2, %s22
        %p212 = scmp.lt.s32.totalorder %s21, 1
        %s213 = scalar_select %p212, %s21, 1
        %p214 = scmp.lt.s32.totalorder %s211, 1
        %s215 = scalar_select %p214, %s211, 1
        %s216 = smul.addr %s213, 2
        %s217 = sadd.s32 %s215, %s216
        %s218 = smul.addr %s217, 8
        %s219 = scalar_lea.vmem %s0, %s218
        %s220 = smul.u32 2, %s22
        %s221 = smul.u32 2, %s22
        %p222 = scmp.lt.s32.totalorder %s21, 1
        %s223 = scalar_select %p222, %s21, 1
        %p224 = scmp.lt.s32.totalorder %s221, 1
        %s225 = scalar_select %p224, %s221, 1
        %s226 = smul.addr %s223, 2
        %s227 = sadd.s32 %s225, %s226
        %s228 = scalar_lea.vmem %s1, %s227
        %s229 = smul.u32 2, %s22
        %p230 = scmp.eq.s32.totalorder %s22, 0
        // Predicated region
        $region33: #{tpu_custom_call.1} parent=31 // pred_check
          %p231 = pneg %p230
        $region34: #{tpu_custom_call.1} parent=31 // pred_check_branch
          %233 = sbr.rel (%p231) target = $region36
        $region35: #{tpu_custom_call.1} parent=31 // pred_region
          %v234 = vlaneseq
          %vm235 = vcmp.ge.s32.totalorder %v234, 0
          %vm236 = vcmp.lt.s32.totalorder %v234, 256
          %vm237 = vmand %vm235, %vm236
          %238 = vst.msk [vmem:[%s210] sm:$0x3] %vm237, 0.0
        $region36: #{tpu_custom_call.1} parent=31 // pred_fallthru
          _
        %v239 = vld [vmem:[%s219] sm:$0x1f]
        %v240 = vld [vmem:[%s219 + $0x8] sm:$0x1f]
        %v241 = vld [vmem:[%s228] sm:$0x3]
        %v242 = vld [vmem:[%s2] sm:$0x1f]
        %vm243 = vcmask 1044480
        %v244 = vsel %vm243, %v239, -inf
        %v245 = vrot.slane %v244, 4
        %v246 = vmax.f32 %v244, %v245
        %v247 = vrot.slane %v246, 2
        %v248 = vmax.f32 %v246, %v247
        %v249 = vrot.slane %v248, 1
        %v250 = vmax.f32 %v248, %v249
        %v251 = vsel %vm243, %v240, -inf
        %v252 = vrot.slane %v251, 4
        %v253 = vmax.f32 %v251, %v252
        %v254 = vrot.slane %v253, 2
        %v255 = vmax.f32 %v253, %v254
        %v256 = vrot.slane %v255, 1
        %v257 = vmax.f32 %v255, %v256
        %v258 = vsub.f32 %v239, %v250
        %v259 = vsub.f32 %v240, %v257
        %v260 = vmul.f32 %v258, 1.442695
        %v261 = vpow.pop %v260
        %v262 = vmul.f32 %v259, 1.442695
        %v263 = vpow.pop %v262
        %v264 = vsel %vm243, %v261, 0.0
        %v265 = vrot.slane %v264, 4
        %v266 = vadd.f32 %v264, %v265
        %v267 = vrot.slane %v266, 2
        %v268 = vadd.f32 %v266, %v267
        %v269 = vrot.slane %v268, 1
        %v270 = vadd.f32 %v268, %v269
        %v271 = vsel %vm243, %v263, 0.0
        %v272 = vrot.slane %v271, 4
        %v273 = vadd.f32 %v271, %v272
        %v274 = vrot.slane %v273, 2
        %v275 = vadd.f32 %v273, %v274
        %v276 = vrot.slane %v275, 1
        %v277 = vadd.f32 %v275, %v276
        %v278 = vlaneseq
        %v279 = vshrl.u32 %v278, 7
        %v280 = vlaneseq
        %v281 = vshrl.u32 %v280, 7
        %v282 = vsub.s32 0, %v281
        %v283 = vrot.slane %v241, %v282
        %v284 = vlaneseq
        %v285 = vshrl.u32 %v284, 7
        %v286 = vsub.s32 1, %v285
        %v287 = vrot.slane %v241, %v286
        %vm288 = vcmp.eq.s32.totalorder %v279, %v283
        %vm289 = vcmp.eq.s32.totalorder %v279, %v287
        %v290 = vsel %vm288, 1, 0
        %v291 = vsel %vm289, 1, 0
        %v292 = vcvt.s32.f32 %v290
        %v293 = vcvt.s32.f32 %v291
        %v294 = vmul.f32 %v239, %v292
        %v295 = vmul.f32 %v240, %v293
        %v296 = vsel %vm243, %v294, 0.0
        %v297 = vrot.slane %v296, 4
        %v298 = vadd.f32 %v296, %v297
        %v299 = vrot.slane %v298, 2
        %v300 = vadd.f32 %v298, %v299
        %v301 = vrot.slane %v300, 1
        %v302 = vadd.f32 %v300, %v301
        %v303 = vsel %vm243, %v295, 0.0
        %v304 = vrot.slane %v303, 4
        %v305 = vadd.f32 %v303, %v304
        %v306 = vrot.slane %v305, 2
        %v307 = vadd.f32 %v305, %v306
        %v308 = vrot.slane %v307, 1
        %v309 = vadd.f32 %v307, %v308
        %311 = vset.pattern.permute.xlu0 0
        %312 = vperm.xlu0 %311, %v242
        %v313 = vpop.permute.xlu0 %312
        %v315 = vmul.f32 %v313, %v292
        %v316 = vmul.f32 %v313, %v293
        %v317 = vsel %vm243, %v315, 0.0
        %v318 = vrot.slane %v317, 4
        %v319 = vadd.f32 %v317, %v318
        %v320 = vrot.slane %v319, 2
        %v321 = vadd.f32 %v319, %v320
        %v322 = vrot.slane %v321, 1
        %v323 = vadd.f32 %v321, %v322
        %v324 = vsel %vm243, %v316, 0.0
        %v325 = vrot.slane %v324, 4
        %v326 = vadd.f32 %v324, %v325
        %v327 = vrot.slane %v326, 2
        %v328 = vadd.f32 %v326, %v327
        %v329 = vrot.slane %v328, 1
        %v330 = vadd.f32 %v328, %v329
        %v331 = vsub.f32 %v302, %v250
        %v332 = vsub.f32 %v309, %v257
        %v333 = vlog2.pop %v270
        %v334 = vmul.f32 %v333, 0.6931472
        %v335 = vlog2.pop %v277
        %v336 = vmul.f32 %v335, 0.6931472
        %v337 = vsub.f32 %v331, %v334
        %v338 = vsub.f32 %v332, %v336
        %v339 = vmul.f32 %v337, 1.442695
        %v340 = vpow.pop %v339
        %v341 = vmul.f32 %v338, 1.442695
        %v342 = vpow.pop %v341
        %v343 = vsub.f32 1.0, %v340
        %v344 = vsub.f32 1.0, %v342
        %v345 = vmul.f32 %v343, %v343
        %v346 = vmul.f32 %v344, %v344
        %v347 = vsub.f32 0.0, %v323
        %v348 = vsub.f32 0.0, %v330
        %v349 = vmul.f32 %v347, %v345
        %v350 = vmul.f32 %v348, %v346
        %v351 = vmul.f32 %v349, %v337
        %v352 = vmul.f32 %v350, %v338
        %v353 = vld [vmem:[%s210] sm:$0x3]
        %v356 = vcombine.low %v351, %v352
        %v358 = vunpack.c.l.s4 1966171168
        %v359 = vunpack.c.0.s8 %v358
        %v360 = vlaneseq
        %v361 = vshrl.u32 %v360, 7
        %v362 = vsub.s32 %v359, %v361
        %v363 = vrot.slane %v356, %v362
        %v365 = vunpack.c.l.s4 1966171168
        %v366 = vunpack.c.0.s8 %v365
        %v367 = vlaneseq
        %v368 = vshrl.u32 %v367, 7
        %v369 = vsub.s32 %v366, %v368
        %v370 = vrot.slane %v363, %v369
        %v372 = vadd.f32 %v353, %v370
        %v373 = vlaneseq
        %vm374 = vcmp.ge.s32.totalorder %v373, 0
        %vm375 = vcmp.lt.s32.totalorder %v373, 256
        %vm376 = vmand %vm374, %vm375
        %377 = vst.msk [vmem:[%s210] sm:$0x3] %vm376, %v372
        %s378 = sand.u32 %s114, 1
        %s379 = scalar_lea.sflag [#allocation3], %s378
        %s380 = sand.u32 %s114, 1
        %s381 = smul.addr %s380, 2
        %s382 = scalar_lea.vmem [#allocation2], %s381
        // Predicated region
        $region37: #{tpu_custom_call.1} parent=31 // pred_check
          %p383 = pneg %p124
        $region38: #{tpu_custom_call.1} parent=31 // pred_check_branch
          %385 = sbr.rel (%p383) target = $region40
        $region39: #{tpu_custom_call.1} parent=31 // pred_region
          %s387 = ssub.s32 32, 32
          %388 = vsyncadd %s379, %s387
          %s389 = smul.addr %s21, 2
          %s390 = smul.addr %s389, 16
          %s391 = scalar_lea.hbm %s3, %s390
          %s393 = sshll.u32 %s382, 4
          %s394 = int_to_ptr.vmem [resolvable:$true] %s393
          %396 = dma.vmem_to_hbm [thread:$0]  %s394, 32, %s391, %s379
        $region40: #{tpu_custom_call.1} parent=31 // pred_fallthru
          _
      $region32: #{tpu_custom_call.1} parent=5 // pred_fallthru
        _
      %p397 = scmp.le.s32.totalorder 2, %s12
      // Predicated region
      $region41: #{tpu_custom_call.1} parent=5 // pred_check
        %p398 = pneg %p397
      $region42: #{tpu_custom_call.1} parent=5 // pred_check_branch
        %400 = sbr.rel (%p398) target = $region44
      $region43: #{tpu_custom_call.1} parent=5 // pred_region
        %s401 = ssub.s32 %s12, 2
        // Predicated region
        $region45: #{tpu_custom_call.1} parent=43 // pred_check
          %p402 = pneg %p130
        $region46: #{tpu_custom_call.1} parent=43 // pred_check_branch
          %404 = sbr.rel (%p402) target = $region48
        $region47: #{tpu_custom_call.1} parent=43 // pred_region
          %s405 = sand.u32 %s115, 1
          %s406 = scalar_lea.sflag [#allocation3], %s405
          %s407 = sand.u32 %s115, 1
          %s408 = smul.addr %s407, 2
          %s409 = scalar_lea.vmem [#allocation2], %s408
          %410 = dma.done %s406, 32
        $region48: #{tpu_custom_call.1} parent=43 // pred_fallthru
          _
      $region44: #{tpu_custom_call.1} parent=5 // pred_fallthru
        _
    $region6: #{tpu_custom_call.1} parent=1 // loop_footer
      %s16 = sadd.s32 1, %s12
    $region7: #{tpu_custom_call.1} parent=1 // loop_footer_branch
      %11 = sbr.rel target = $region3
    $region8: #{tpu_custom_call.1} parent=1 // loop_exit
      _
    %411 = vsyncpa [#allocation3], 1
    %s412 = scalar_lea.sflag [#allocation3], 1
    %413 = vsyncpa %s412, 1

</llo_original>
